<compile_context>
chip_gen: v7x
topology: tpu7x:2x2x1
jax: 0.10.0
libtpu: 0.0.40
codegen_flags: <defaults>
</compile_context>

<pallas_src>
import functools

import jax
import jax.numpy as jnp
from jax import lax
from jax.experimental import pallas as pl
from jax.experimental.pallas import tpu as pltpu


# -----------------------------------------------------------------------------
# Pallas kernel: GroupNorm -> (SiLU) -> (+ per-channel add) -> (+ residual add)
# -----------------------------------------------------------------------------

def _fused_gn_silu_kernel(*refs, inv_n, eps, fuse_silu, has_cadd, has_res):
    """Block layout: x is (Bt, Gt, sub, lane); (sub, lane) spans one group's
    cpg*H*W elements, statistics are per (batch, group) row."""
    it = iter(refs)
    x_ref, w_ref, b_ref = next(it), next(it), next(it)
    cadd_ref = next(it) if has_cadd else None
    res_ref = next(it) if has_res else None
    o_ref = next(it)

    x = x_ref[...].astype(jnp.float32)                      # (Bt, Gt, sub, lane)

    # Vectorized two-stage reduction over the minor (sublane, lane) dims.
    mean = jnp.sum(x, axis=(2, 3), keepdims=True) * inv_n   # (Bt, Gt, 1, 1)
    xc = x - mean                                           # centered, reused
    var = jnp.sum(xc * xc, axis=(2, 3), keepdims=True) * inv_n
    inv_std = lax.rsqrt(var + eps)                          # EUP rsqrt

    # Fold inv_std into the compact per-channel weight first (tiny tensors),
    # then a single full-size multiply; w/b broadcast is a free lane splat.
    scale = inv_std * w_ref[...]                            # (Bt, Gt, sub, 1)
    out = xc * scale + b_ref[...]

    if fuse_silu:
        out = out * jax.nn.sigmoid(out)                     # stable SiLU
    if has_cadd:                                            # time-embedding add
        out = out + cadd_ref[...].astype(jnp.float32)       # (Bt, Gt, sub, 1)
    if has_res:                                             # residual add
        out = out + res_ref[...].astype(jnp.float32)        # full tile

    o_ref[...] = out.astype(o_ref.dtype)                    # one lane-dense store


# -----------------------------------------------------------------------------
# Wrapper helpers
# -----------------------------------------------------------------------------

def _round_up(x, m):
    return (x + m - 1) // m * m


def _pick_layout(cpg, hw):
    """Factor one group's cpg*hw elements into minor dims (sub, lane) =
    (cpg*hf, hw//hf) minimizing (8, 128) vreg/VMEM padding (lane-dense ties)."""
    best = None
    for hf in range(1, hw + 1):
        if hw % hf:
            continue
        sub, lane = cpg * hf, hw // hf
        key = (_round_up(sub, 8) * _round_up(lane, 128), -lane)
        if best is None or key < best[0]:
            best = (key, hf, sub, lane)
    return best[1], best[2], best[3]


def _vmem_limit_bytes():
    """~75% of physical VMEM (v7x: 48 MiB of 64; v5e/v6e: 96 MiB of 128)."""
    try:
        cap = int(getattr(pltpu.get_tpu_info(), "vmem_capacity_bytes",
                          128 * 1024 * 1024))
    except Exception:
        cap = 64 * 1024 * 1024      # conservative fallback
    return min(cap * 3 // 4, 100 * 1024 * 1024)


def _choose_tiles(batch, groups, max_pairs, min_steps):
    """Pick (Bt, Gt) so the block fits the budget and the grid has >= min_steps
    steps (pipeline overlap; both TensorCores on v7x get work)."""
    max_pairs = max(1, max_pairs)
    if max_pairs >= groups:
        gt, bt = groups, max(1, min(batch, max_pairs // groups))
    else:
        gt, bt = max_pairs, 1
    while (pl.cdiv(batch, bt) * pl.cdiv(groups, gt) < min_steps
           and (bt > 1 or gt > 1)):
        if bt > 1:
            bt = pl.cdiv(bt, 2)     # prefer splitting the batch axis
        else:
            gt = pl.cdiv(gt, 2)
    return bt, gt


def fused_group_norm(x, weight, bias, num_groups, eps=1e-5, *, fuse_silu=False,
                     channel_add=None, residual=None):
    """GroupNorm matching torch.nn.GroupNorm semantics, optionally fused with a
    SiLU epilogue, a per-(batch, channel) add and/or a full-tensor residual add.

    x: (B, C, H, W); weight/bias: (C,); channel_add: (B, C) or None;
    residual: (B, C, H, W) or None.  Returns (B, C, H, W) in x.dtype.
    """
    B, C, H, W = x.shape
    assert C % num_groups == 0
    G, cpg, HW = num_groups, C // num_groups, H * W

    # Layout: one group's cpg*HW elements become the minor (sub, lane) dims.
    hf, sub, lane = _pick_layout(cpg, HW)
    x4 = x.reshape(B, G, sub, lane)                          # pure reshape

    # Compact per-channel affine params: each channel's weight repeated hf
    # times along the sub axis -> (1, G, sub, 1), not a C*HW spatial broadcast.
    w4 = jnp.repeat(weight.astype(jnp.float32).reshape(G, cpg), hf,
                    axis=1).reshape(1, G, sub, 1)
    b4 = jnp.repeat(bias.astype(jnp.float32).reshape(G, cpg), hf,
                    axis=1).reshape(1, G, sub, 1)

    # VMEM-aware tile selection: count double-buffered in/out blocks plus ~3
    # block-sized f32 intermediates; keep a raw x block under ~16 MiB.
    pad_bg = _round_up(sub, 8) * _round_up(lane, 128)        # padded elems/(b,g)
    bytes_x = pad_bg * x.dtype.itemsize
    live_per_bg = 4 * bytes_x + 3 * pad_bg * 4
    if residual is not None:
        live_per_bg += 2 * pad_bg * residual.dtype.itemsize
    vmem_limit = _vmem_limit_bytes()
    budget = vmem_limit - (2 << 20)                          # headroom (w/b etc.)
    max_pairs = min(budget // live_per_bg, (16 << 20) // bytes_x)
    bt, gt = _choose_tiles(B, G, max_pairs, min_steps=min(4, B * G))
    grid = (pl.cdiv(B, bt), pl.cdiv(G, gt))                  # ragged B/G is fine:
                                                             # stats are per-row

    operands = [x4, w4, b4]
    in_specs = [
        pl.BlockSpec((bt, gt, sub, lane), lambda b, g: (b, g, 0, 0)),
        # weight/bias are tiny now, so their default double-buffering costs
        # only O(KiB) of VMEM (no need to pin to a single buffer).
        pl.BlockSpec((1, gt, sub, 1), lambda b, g: (0, g, 0, 0)),
        pl.BlockSpec((1, gt, sub, 1), lambda b, g: (0, g, 0, 0)),
    ]
    if channel_add is not None:
        assert channel_add.shape == (B, C)
        cadd4 = jnp.repeat(channel_add.astype(jnp.float32).reshape(B, G, cpg),
                           hf, axis=2).reshape(B, G, sub, 1)
        operands.append(cadd4)
        in_specs.append(pl.BlockSpec((bt, gt, sub, 1), lambda b, g: (b, g, 0, 0)))
    if residual is not None:
        assert residual.shape == x.shape
        operands.append(residual.reshape(B, G, sub, lane))
        in_specs.append(
            pl.BlockSpec((bt, gt, sub, lane), lambda b, g: (b, g, 0, 0)))

    kernel = functools.partial(
        _fused_gn_silu_kernel, inv_n=1.0 / float(cpg * HW), eps=float(eps),
        fuse_silu=fuse_silu, has_cadd=channel_add is not None,
        has_res=residual is not None)

    out = pl.pallas_call(
        kernel,
        out_shape=jax.ShapeDtypeStruct((B, G, sub, lane), x.dtype),
        grid_spec=pltpu.PrefetchScalarGridSpec(
            num_scalar_prefetch=0,
            grid=grid,
            in_specs=in_specs,
            out_specs=pl.BlockSpec((bt, gt, sub, lane), lambda b, g: (b, g, 0, 0)),
        ),
        compiler_params=pltpu.CompilerParams(
            dimension_semantics=("parallel", "parallel"),    # batch & group axes
            vmem_limit_bytes=int(vmem_limit),
        ),
    )(*operands)
    return out.reshape(B, C, H, W)


# -----------------------------------------------------------------------------
# ResidualBlock forward (convs / linear stay as XLA ops; see TODO at the top)
# -----------------------------------------------------------------------------

def _silu(v):
    return v * jax.nn.sigmoid(v)


def _conv2d_nchw(x, w, b, padding):
    out = lax.conv_general_dilated(
        x, w, window_strides=(1, 1),
        padding=((padding, padding), (padding, padding)),
        dimension_numbers=("NCHW", "OIHW", "NCHW"))
    return out + b[None, :, None, None]


def init_residual_block_params(key, c_in, c_out, step_dim):
    """Parameters mirroring the PyTorch ResidualBlock initialization."""
    ks = jax.random.split(key, 5)

    def conv_init(k, co, ci, kh, kw):
        sf = 1.0 / (ci * kh * kw) ** 0.5
        kw_, kb_ = jax.random.split(k)
        return (jax.random.uniform(kw_, (co, ci, kh, kw), jnp.float32, -sf, sf),
                jax.random.uniform(kb_, (co,), jnp.float32, -sf, sf))

    params = {}
    if c_in != c_out:
        params["res_conv_w"], params["res_conv_b"] = conv_init(ks[0], c_out, c_in, 1, 1)
    params["conv1_w"], params["conv1_b"] = conv_init(ks[1], c_out, c_in, 3, 3)
    params["conv2_w"], params["conv2_b"] = conv_init(ks[2], c_out, c_out, 3, 3)
    sf = 1.0 / step_dim ** 0.5
    params["lin_w"] = jax.random.uniform(ks[3], (step_dim, c_out), jnp.float32, -sf, sf)
    params["lin_b"] = jax.random.uniform(ks[4], (c_out,), jnp.float32, -sf, sf)
    # GroupNorm.reset_parameters(): weight = 1, bias = 0.
    params["gn1_w"] = jnp.ones((c_out,), jnp.float32)
    params["gn1_b"] = jnp.zeros((c_out,), jnp.float32)
    params["gn2_w"] = jnp.ones((c_out,), jnp.float32)
    params["gn2_b"] = jnp.zeros((c_out,), jnp.float32)
    return params


def residual_block_forward(params, x, time_emb, *, groups, eps=1e-5):
    """ResidualBlock.forward: both GroupNorm+SiLU stages run as Pallas kernels,
    with the time-embedding add and the final residual add fused as epilogues."""
    if "res_conv_w" in params:                               # left branch
        x_skip = _conv2d_nchw(x, params["res_conv_w"], params["res_conv_b"], 0)
    else:
        x_skip = x
    # num_steps_block: SiLU -> Linear (broadcast handled by the fused kernel).
    temb = _silu(time_emb) @ params["lin_w"] + params["lin_b"]       # (B, C_out)
    # image_block: Conv3x3 -> [GroupNorm -> SiLU -> (+ temb)] fused kernel.
    h = _conv2d_nchw(x, params["conv1_w"], params["conv1_b"], 1)
    h = fused_group_norm(h, params["gn1_w"], params["gn1_b"], groups, eps,
                         fuse_silu=True, channel_add=temb)
    # out_block: Conv3x3 -> [GroupNorm -> SiLU -> (+ x_skip)] fused kernel.
    h = _conv2d_nchw(h, params["conv2_w"], params["conv2_b"], 1)
    return fused_group_norm(h, params["gn2_w"], params["gn2_b"], groups, eps,
                            fuse_silu=True, residual=x_skip)


# -----------------------------------------------------------------------------
# Pure-JAX references (match the PyTorch module semantics)
# -----------------------------------------------------------------------------

def group_norm_ref(x, weight, bias, num_groups, eps=1e-5):
    B, C, H, W = x.shape
    cpg = C // num_groups
    xg = x.reshape(B, num_groups, cpg, H, W)
    mean = xg.mean(axis=(2, 3, 4), keepdims=True)
    var = ((xg - mean) ** 2).mean(axis=(2, 3, 4), keepdims=True)
    xn = ((xg - mean) / jnp.sqrt(var + eps)).reshape(B, C, H, W)
    return xn * weight[None, :, None, None] + bias[None, :, None, None]


def residual_block_ref(params, x, time_emb, *, groups, eps=1e-5):
    if "res_conv_w" in params:
        x_skip = _conv2d_nchw(x, params["res_conv_w"], params["res_conv_b"], 0)
    else:
        x_skip = x
    h = _conv2d_nchw(x, params["conv1_w"], params["conv1_b"], 1)
    h = _silu(group_norm_ref(h, params["gn1_w"], params["gn1_b"], groups, eps))
    temb = _silu(time_emb) @ params["lin_w"] + params["lin_b"]
    h = h + temb[:, :, None, None]
    h = _conv2d_nchw(h, params["conv2_w"], params["conv2_b"], 1)
    h = _silu(group_norm_ref(h, params["gn2_w"], params["gn2_b"], groups, eps))
    return x_skip + h


if __name__ == "__main__":
    key = jax.random.PRNGKey(0)
    k_x, k_t, k_w, k_b, k_p = jax.random.split(key, 5)

    B, C_in, C_out, H, W = 2, 4, 8, 16, 16
    step_dim, groups = 8, 4

    x = jax.random.normal(k_x, (B, C_in, H, W), jnp.float32)
    time_emb = jax.random.normal(k_t, (B, step_dim), jnp.float32)

    # 1) Standalone GroupNorm with non-trivial affine params vs. pure-JAX ref.
    gw = jax.random.normal(k_w, (C_in,), jnp.float32)
    gb = jax.random.normal(k_b, (C_in,), jnp.float32)
    got = jax.block_until_ready(fused_group_norm(x, gw, gb, 2))
    ref = group_norm_ref(x, gw, gb, 2)
    assert got.shape == x.shape
    assert jnp.allclose(got, ref, atol=1e-5, rtol=1e-5)

    # 2) Fused GroupNorm + SiLU (the pattern used twice inside ResidualBlock).
    got_s = jax.block_until_ready(fused_group_norm(x, gw, gb, 2, fuse_silu=True))
    assert jnp.allclose(got_s, _silu(ref), atol=1e-5, rtol=1e-5)

    # 3) Full ResidualBlock forward (convs via XLA; GN+SiLU + temb add +
    #    residual add fused in the Pallas kernels).
    params = init_residual_block_params(k_p, C_in, C_out, step_dim)
    out = jax.block_until_ready(
        residual_block_forward(params, x, time_emb, groups=groups))
    ref_out = residual_block_ref(params, x, time_emb, groups=groups)
    assert out.shape == (B, C_out, H, W)
    assert jnp.allclose(out, ref_out, atol=1e-4, rtol=1e-4)

    print("KERNEL_OK")
</pallas_src>

<mosaic_0001>
module attributes {stable_mosaic.version = 11 : i64} {
  func.func @_fused_gn_silu_kernel(%arg0: i32, %arg1: i32, %arg2: memref<1x1x4x128xf32, #tpu.memory_space<vmem>>, %arg3: memref<1x1x4x1xf32, #tpu.memory_space<vmem>>, %arg4: memref<1x1x4x1xf32, #tpu.memory_space<vmem>>, %arg5: memref<1x1x4x128xf32, #tpu.memory_space<vmem>>) attributes {dimension_semantics = [#tpu.dimension_semantics<parallel>, #tpu.dimension_semantics<parallel>], iteration_bounds = array<i64: 2, 2>, scalar_prefetch = 0 : i64, scratch_operands = 0 : i64, tpu.core_type = #tpu.core_type<tc>, window_params = [{transform_indices = @transform_0, window_bounds = array<i64: 1, 1, 4, 128>}, {transform_indices = @transform_1, window_bounds = array<i64: 1, 1, 4, 1>}, {transform_indices = @transform_2, window_bounds = array<i64: 1, 1, 4, 1>}, {transform_indices = @transform_3, window_bounds = array<i64: 1, 1, 4, 128>}]} {
    %c0 = arith.constant 0 : index
    %c0_0 = arith.constant 0 : index
    %c0_1 = arith.constant 0 : index
    %c0_2 = arith.constant 0 : index
    %0 = vector.load %arg2[%c0, %c0_0, %c0_1, %c0_2] : memref<1x1x4x128xf32, #tpu.memory_space<vmem>>, vector<1x1x4x128xf32>
    %cst = arith.constant dense<0.000000e+00> : vector<1x1xf32>
    %1 = vector.multi_reduction <add>, %0, %cst [2, 3] : vector<1x1x4x128xf32> to vector<1x1xf32>
    %2 = vector.shape_cast %1 : vector<1x1xf32> to vector<1x1x1x1xf32>
    %cst_3 = arith.constant 0.001953125 : f32
    %3 = vector.broadcast %cst_3 : f32 to vector<1x1x1x1xf32>
    %4 = arith.mulf %2, %3 : vector<1x1x1x1xf32>
    %5 = vector.broadcast %4 : vector<1x1x1x1xf32> to vector<1x1x4x128xf32>
    %6 = arith.subf %0, %5 : vector<1x1x4x128xf32>
    %7 = arith.mulf %6, %6 : vector<1x1x4x128xf32>
    %cst_4 = arith.constant dense<0.000000e+00> : vector<1x1xf32>
    %8 = vector.multi_reduction <add>, %7, %cst_4 [2, 3] : vector<1x1x4x128xf32> to vector<1x1xf32>
    %9 = vector.shape_cast %8 : vector<1x1xf32> to vector<1x1x1x1xf32>
    %cst_5 = arith.constant 0.001953125 : f32
    %10 = vector.broadcast %cst_5 : f32 to vector<1x1x1x1xf32>
    %11 = arith.mulf %9, %10 : vector<1x1x1x1xf32>
    %cst_6 = arith.constant 9.99999974E-6 : f32
    %12 = vector.broadcast %cst_6 : f32 to vector<1x1x1x1xf32>
    %13 = arith.addf %11, %12 : vector<1x1x1x1xf32>
    %14 = math.rsqrt %13 : vector<1x1x1x1xf32>
    %c0_7 = arith.constant 0 : index
    %c0_8 = arith.constant 0 : index
    %c0_9 = arith.constant 0 : index
    %c0_10 = arith.constant 0 : index
    %15 = vector.load %arg3[%c0_7, %c0_8, %c0_9, %c0_10] : memref<1x1x4x1xf32, #tpu.memory_space<vmem>>, vector<1x1x4x1xf32>
    %16 = vector.broadcast %14 : vector<1x1x1x1xf32> to vector<1x1x4x1xf32>
    %17 = arith.mulf %16, %15 : vector<1x1x4x1xf32>
    %18 = vector.broadcast %17 : vector<1x1x4x1xf32> to vector<1x1x4x128xf32>
    %19 = arith.mulf %6, %18 : vector<1x1x4x128xf32>
    %c0_11 = arith.constant 0 : index
    %c0_12 = arith.constant 0 : index
    %c0_13 = arith.constant 0 : index
    %c0_14 = arith.constant 0 : index
    %20 = vector.load %arg4[%c0_11, %c0_12, %c0_13, %c0_14] : memref<1x1x4x1xf32, #tpu.memory_space<vmem>>, vector<1x1x4x1xf32>
    %21 = vector.broadcast %20 : vector<1x1x4x1xf32> to vector<1x1x4x128xf32>
    %22 = arith.addf %19, %21 : vector<1x1x4x128xf32>
    %c0_15 = arith.constant 0 : index
    %c0_16 = arith.constant 0 : index
    %c0_17 = arith.constant 0 : index
    %c0_18 = arith.constant 0 : index
    %23 = vector.load %arg5[%c0_15, %c0_16, %c0_17, %c0_18] : memref<1x1x4x128xf32, #tpu.memory_space<vmem>>, vector<1x1x4x128xf32>
    tpu.vector_store %arg5[%c0_15, %c0_16, %c0_17, %c0_18], %22 {strides = array<i32>} : memref<1x1x4x128xf32, #tpu.memory_space<vmem>>, vector<1x1x4x128xf32>,
    return
  }
  func.func @transform_0(%arg0: i32, %arg1: i32) -> (i32, i32, i32, i32) {
    %c0_i32 = arith.constant 0 : i32
    %c0_i32_0 = arith.constant 0 : i32
    %c0_i32_1 = arith.constant 0 : i32
    return %arg0, %arg1, %c0_i32, %c0_i32_0 : i32, i32, i32, i32
  }
  func.func @transform_1(%arg0: i32, %arg1: i32) -> (i32, i32, i32, i32) {
    %c0_i32 = arith.constant 0 : i32
    %c0_i32_0 = arith.constant 0 : i32
    %c0_i32_1 = arith.constant 0 : i32
    %c0_i32_2 = arith.constant 0 : i32
    return %c0_i32, %arg1, %c0_i32_0, %c0_i32_1 : i32, i32, i32, i32
  }
  func.func @transform_2(%arg0: i32, %arg1: i32) -> (i32, i32, i32, i32) {
    %c0_i32 = arith.constant 0 : i32
    %c0_i32_0 = arith.constant 0 : i32
    %c0_i32_1 = arith.constant 0 : i32
    %c0_i32_2 = arith.constant 0 : i32
    return %c0_i32, %arg1, %c0_i32_0, %c0_i32_1 : i32, i32, i32, i32
  }
  func.func @transform_3(%arg0: i32, %arg1: i32) -> (i32, i32, i32, i32) {
    %c0_i32 = arith.constant 0 : i32
    %c0_i32_0 = arith.constant 0 : i32
    %c0_i32_1 = arith.constant 0 : i32
    return %arg0, %arg1, %c0_i32, %c0_i32_0 : i32, i32, i32, i32
  }
}

</mosaic_0001>

<llo_original>
// kernel: tpu_custom_call.1
$region0: #{tpu_custom_call.1}
  #allocation0 [shape = 'u32[]', space=smem, size = 0x4, offset = 0x4, fixed_abs, tag = 'smem constant byte address 0x4 - core index']
  #allocation1 [shape = 'u32[144,128]{1,0:T(1,128)}', space=vmem, size = 0x12000, scoped, tag = 'internal scratch']
  %s0 = inlined_call_operand.vmem [shape: f32[2,2,4,128], index: 0, kind: input, shape index: {}]
  %s1 = inlined_call_operand.vmem [shape: f32[1,2,4,1], index: 1, kind: input, shape index: {}]
  %s2 = inlined_call_operand.vmem [shape: f32[1,2,4,1], index: 2, kind: input, shape index: {}]
  %s3 = inlined_call_operand.hbm [shape: f32[2,2,4,128], index: 3, kind: output, shape index: {}]
  %s4 = sld [smem:[#allocation0]]
  $region45: #{tpu_custom_call.1} parent=0
    _
  %s6 = ssub.s32 1, %s4
  %s7 = scalar_select 0, %s6, %s4
  $region1: #{tpu_custom_call.1} parent=0
    #allocation2 [shape = 'u8[4096]{0}', space=vmem, size = 0x1000, scoped, tag = 'output window, operand 0']
    #allocation3 [shape = 's32[2]{0}', space=sflag, size = 0x8, scoped, tag = 'scoped memory for tpu_custom_call.1']
    %8 = vsyncpa [#allocation3], 0
    %s9 = scalar_lea.sflag [#allocation3], 1
    %10 = vsyncpa %s9, 0
    loop: start=0, step=1, limit=6
    $region2: #{tpu_custom_call.1} parent=1 // loop_pre_header
      _
    $region3: #{tpu_custom_call.1} parent=1 // loop_header
      %s12 = sphi 0, %s16
      %p13 = scmp.ge.s32.totalorder %s12, 6
      %s19 = sphi 0, %s31
      %s20 = sphi 0, %s27
      %s21 = sphi 0, %s19
      %s22 = sphi 0, %s20
      %s23 = sphi 0, %s21
      %s24 = sphi 0, %s22
      %s36 = sphi 0, %s38
      %s39 = sphi 0, %s36
      %s40 = sphi 0, %s39
      %s56 = sphi 0, %s40
      %s62 = sphi 0, %s64
      %s65 = sphi 0, %s62
      %s66 = sphi 0, %s65
      %s82 = sphi 0, %s66
      %s88 = sphi 0, %s90
      %s91 = sphi 0, %s88
      %s92 = sphi 0, %s91
      %s108 = sphi 0, %s92
      %s116 = sphi 0, %s118
      %s119 = sphi 0, %s116
      %s120 = sphi 0, %s119
      %s136 = sphi 0, %s120
    $region4: #{tpu_custom_call.1} parent=1 // loop_header_branch
      %15 = sbr.rel (%p13) target = $region8
    $region5: #{tpu_custom_call.1} parent=1 // loop_body
      %s17 = ssub.s32 %s12, 1
      %s18 = ssub.s32 %s12, 2
      %s25 = sadd.s32 1, %s20
      %p26 = scmp.ge.s32.totalorder %s25, 2
      %s27 = scalar_select %p26, 0, %s25
      %s28 = sadd.s32 1, %s19
      %s29 = scalar_select %p26, %s28, %s19
      %p30 = scmp.ge.s32.totalorder %s29, 2
      %s31 = scalar_select %p30, 0, %s29
      %s32 = ssub.s32 %s19, %s31
      %s33 = ssub.s32 %s20, %s27
      %s34 = sor.u32 %s32, %s33
      %p35 = scmp.eq.s32.totalorder %s34, 0
      %s37 = sadd.s32 %s36, 1
      %s38 = scalar_select %p35, %s36, %s37
      %p41 = pneg %p35
      %p42 = scmp.eq.s32.totalorder %s12, 3
      %p43 = por %p41, %p42
      %p44 = scmp.ne.s32.totalorder %s36, %s39
      %p45 = scmp.eq.s32.totalorder %s12, 0
      %p46 = por %p44, %p45
      %p47 = scmp.ne.s32.totalorder %s36, %s39
      %p48 = scmp.eq.s32.totalorder %s17, 3
      %p49 = por %p47, %p48
      %p50 = scmp.ne.s32.totalorder %s39, %s40
      %p51 = scmp.eq.s32.totalorder %s17, 0
      %p52 = por %p50, %p51
      %p53 = scmp.ne.s32.totalorder %s39, %s40
      %p54 = scmp.eq.s32.totalorder %s18, 3
      %p55 = por %p53, %p54
      %p57 = scmp.ne.s32.totalorder %s40, %s56
      %p58 = scmp.eq.s32.totalorder %s18, 0
      %p59 = por %p57, %p58
      %s60 = ssub.s32 %s20, %s27
      %p61 = scmp.eq.s32.totalorder %s60, 0
      %s63 = sadd.s32 %s62, 1
      %s64 = scalar_select %p61, %s62, %s63
      %p67 = pneg %p61
      %p68 = scmp.eq.s32.totalorder %s12, 3
      %p69 = por %p67, %p68
      %p70 = scmp.ne.s32.totalorder %s62, %s65
      %p71 = scmp.eq.s32.totalorder %s12, 0
      %p72 = por %p70, %p71
      %p73 = scmp.ne.s32.totalorder %s62, %s65
      %p74 = scmp.eq.s32.totalorder %s17, 3
      %p75 = por %p73, %p74
      %p76 = scmp.ne.s32.totalorder %s65, %s66
      %p77 = scmp.eq.s32.totalorder %s17, 0
      %p78 = por %p76, %p77
      %p79 = scmp.ne.s32.totalorder %s65, %s66
      %p80 = scmp.eq.s32.totalorder %s18, 3
      %p81 = por %p79, %p80
      %p83 = scmp.ne.s32.totalorder %s66, %s82
      %p84 = scmp.eq.s32.totalorder %s18, 0
      %p85 = por %p83, %p84
      %s86 = ssub.s32 %s20, %s27
      %p87 = scmp.eq.s32.totalorder %s86, 0
      %s89 = sadd.s32 %s88, 1
      %s90 = scalar_select %p87, %s88, %s89
      %p93 = pneg %p87
      %p94 = scmp.eq.s32.totalorder %s12, 3
      %p95 = por %p93, %p94
      %p96 = scmp.ne.s32.totalorder %s88, %s91
      %p97 = scmp.eq.s32.totalorder %s12, 0
      %p98 = por %p96, %p97
      %p99 = scmp.ne.s32.totalorder %s88, %s91
      %p100 = scmp.eq.s32.totalorder %s17, 3
      %p101 = por %p99, %p100
      %p102 = scmp.ne.s32.totalorder %s91, %s92
      %p103 = scmp.eq.s32.totalorder %s17, 0
      %p104 = por %p102, %p103
      %p105 = scmp.ne.s32.totalorder %s91, %s92
      %p106 = scmp.eq.s32.totalorder %s18, 3
      %p107 = por %p105, %p106
      %p109 = scmp.ne.s32.totalorder %s92, %s108
      %p110 = scmp.eq.s32.totalorder %s18, 0
      %p111 = por %p109, %p110
      %s112 = ssub.s32 %s19, %s31
      %s113 = ssub.s32 %s20, %s27
      %s114 = sor.u32 %s112, %s113
      %p115 = scmp.eq.s32.totalorder %s114, 0
      %s117 = sadd.s32 %s116, 1
      %s118 = scalar_select %p115, %s116, %s117
      %p121 = pneg %p115
      %p122 = scmp.eq.s32.totalorder %s12, 3
      %p123 = por %p121, %p122
      %p124 = scmp.ne.s32.totalorder %s116, %s119
      %p125 = scmp.eq.s32.totalorder %s12, 0
      %p126 = por %p124, %p125
      %p127 = scmp.ne.s32.totalorder %s116, %s119
      %p128 = scmp.eq.s32.totalorder %s17, 3
      %p129 = por %p127, %p128
      %p130 = scmp.ne.s32.totalorder %s119, %s120
      %p131 = scmp.eq.s32.totalorder %s17, 0
      %p132 = por %p130, %p131
      %p133 = scmp.ne.s32.totalorder %s119, %s120
      %p134 = scmp.eq.s32.totalorder %s18, 3
      %p135 = por %p133, %p134
      %p137 = scmp.ne.s32.totalorder %s120, %s136
      %p138 = scmp.eq.s32.totalorder %s18, 0
      %p139 = por %p137, %p138
      %p140 = scmp.le.s32.totalorder 1, %s12
      %p141 = scmp.lt.s32.totalorder %s12, 5
      %p142 = pnand %p140, %p141
      %p143 = pneg %p142
      // Predicated region
      $region9: #{tpu_custom_call.1} parent=5 // pred_check
        _
      $region10: #{tpu_custom_call.1} parent=5 // pred_check_branch
        %145 = sbr.rel (%p142) target = $region12
      $region11: #{tpu_custom_call.1} parent=5 // pred_region
        %s146 = ssub.s32 %s12, 1
      $region12: #{tpu_custom_call.1} parent=5 // pred_fallthru
        _
      %p147 = scmp.lt.s32.totalorder %s12, 4
      // Predicated region
      $region13: #{tpu_custom_call.1} parent=5 // pred_check
        %p148 = pneg %p147
      $region14: #{tpu_custom_call.1} parent=5 // pred_check_branch
        %150 = sbr.rel (%p148) target = $region16
      $region15: #{tpu_custom_call.1} parent=5 // pred_region
        // Predicated region
        $region17: #{tpu_custom_call.1} parent=15 // pred_check
          %p151 = pneg %p46
        $region18: #{tpu_custom_call.1} parent=15 // pred_check_branch
          %153 = sbr.rel (%p151) target = $region20
        $region19: #{tpu_custom_call.1} parent=15 // pred_region
          %p154 = scmp.lt.s32.totalorder %s19, 1
          %s155 = scalar_select %p154, %s19, 1
          %p156 = scmp.lt.s32.totalorder %s20, 1
          %s157 = scalar_select %p156, %s20, 1
          %s158 = smul.addr %s155, 2
          %s159 = sadd.s32 %s157, %s158
          %s160 = smul.addr %s159, 4
          %s161 = scalar_lea.vmem %s0, %s160
        $region20: #{tpu_custom_call.1} parent=15 // pred_fallthru
          _
        // Predicated region
        $region21: #{tpu_custom_call.1} parent=15 // pred_check
          %p162 = pneg %p72
        $region22: #{tpu_custom_call.1} parent=15 // pred_check_branch
          %164 = sbr.rel (%p162) target = $region24
        $region23: #{tpu_custom_call.1} parent=15 // pred_region
          %p165 = scmp.lt.s32.totalorder %s20, 1
          %s166 = scalar_select %p165, %s20, 1
          %s167 = smul.addr %s166, 4
          %s168 = scalar_lea.vmem %s1, %s167
        $region24: #{tpu_custom_call.1} parent=15 // pred_fallthru
          _
        // Predicated region
        $region25: #{tpu_custom_call.1} parent=15 // pred_check
          %p169 = pneg %p98
        $region26: #{tpu_custom_call.1} parent=15 // pred_check_branch
          %171 = sbr.rel (%p169) target = $region28
        $region27: #{tpu_custom_call.1} parent=15 // pred_region
          %p172 = scmp.lt.s32.totalorder %s20, 1
          %s173 = scalar_select %p172, %s20, 1
          %s174 = smul.addr %s173, 4
          %s175 = scalar_lea.vmem %s2, %s174
        $region28: #{tpu_custom_call.1} parent=15 // pred_fallthru
          _
      $region16: #{tpu_custom_call.1} parent=5 // pred_fallthru
        _
      %p176 = scmp.le.s32.totalorder 1, %s12
      %p177 = scmp.lt.s32.totalorder %s12, 5
      %p178 = pnand %p176, %p177
      %p179 = pneg %p178
      // Predicated region
      $region29: #{tpu_custom_call.1} parent=5 // pred_check
        _
      $region30: #{tpu_custom_call.1} parent=5 // pred_check_branch
        %181 = sbr.rel (%p178) target = $region32
      $region31: #{tpu_custom_call.1} parent=5 // pred_region
        %s182 = ssub.s32 %s12, 1
        %p183 = scmp.lt.s32.totalorder %s21, 1
        %s184 = scalar_select %p183, %s21, 1
        %p185 = scmp.lt.s32.totalorder %s22, 1
        %s186 = scalar_select %p185, %s22, 1
        %s187 = smul.addr %s184, 2
        %s188 = sadd.s32 %s186, %s187
        %s189 = smul.addr %s188, 4
        %s190 = scalar_lea.vmem %s0, %s189
        %p191 = pneg %p52
        %p192 = pneg %p49
        %p193 = scmp.lt.s32.totalorder %s22, 1
        %s194 = scalar_select %p193, %s22, 1
        %s195 = smul.addr %s194, 4
        %s196 = scalar_lea.vmem %s1, %s195
        %p197 = pneg %p78
        %p198 = pneg %p75
        %p199 = scmp.lt.s32.totalorder %s22, 1
        %s200 = scalar_select %p199, %s22, 1
        %s201 = smul.addr %s200, 4
        %s202 = scalar_lea.vmem %s2, %s201
        %p203 = pneg %p104
        %p204 = pneg %p101
        %p205 = pneg %p132
        %p206 = pneg %p129
        %s207 = sand.u32 %s119, 1
        %s208 = scalar_lea.sflag [#allocation3], %s207
        %s209 = sand.u32 %s119, 1
        %s210 = smul.addr %s209, 4
        %s211 = scalar_lea.vmem [#allocation2], %s210
        %p212 = scmp.lt.s32.totalorder %s21, 1
        %s213 = scalar_select %p212, %s21, 1
        %p214 = scmp.lt.s32.totalorder %s22, 1
        %s215 = scalar_select %p214, %s22, 1
        %s216 = smul.addr %s213, 2
        %s217 = sadd.s32 %s215, %s216
        %s218 = smul.addr %s217, 4
        %s219 = scalar_lea.vmem %s0, %s218
        %p220 = scmp.lt.s32.totalorder %s22, 1
        %s221 = scalar_select %p220, %s22, 1
        %s222 = smul.addr %s221, 4
        %s223 = scalar_lea.vmem %s1, %s222
        %p224 = scmp.lt.s32.totalorder %s22, 1
        %s225 = scalar_select %p224, %s22, 1
        %s226 = smul.addr %s225, 4
        %s227 = scalar_lea.vmem %s2, %s226
        %v228 = vld [vmem:[%s219] sm:$0xf]
        %vm229 = vcmask 1043456
        %v230 = vsel %vm229, %v228, 0.0
        %231 = vadd.xlane.f32.xlu0 %v230
        %v232 = vpop.xlane.xlu0 %231
        %v233 = vrot.slane %v232, 4
        %v234 = vadd.f32 %v232, %v233
        %v235 = vrot.slane %v234, 2
        %v236 = vadd.f32 %v234, %v235
        %v237 = vrot.slane %v236, 1
        %v238 = vadd.f32 %v236, %v237
        %v239 = vmul.f32 %v238, 0.001953125
        %v240 = vsub.f32 %v228, %v239
        %v241 = vmul.f32 %v240, %v240
        %v242 = vsel %vm229, %v241, 0.0
        %243 = vadd.xlane.f32.xlu0 %v242
        %v244 = vpop.xlane.xlu0 %243
        %v245 = vrot.slane %v244, 4
        %v246 = vadd.f32 %v244, %v245
        %v247 = vrot.slane %v246, 2
        %v248 = vadd.f32 %v246, %v247
        %v249 = vrot.slane %v248, 1
        %v250 = vadd.f32 %v248, %v249
        %v251 = vmul.f32 %v250, 0.001953125
        %v252 = vadd.f32 %v251, 1e-05
        %v253 = vrsqrt.pop %v252
        %v254 = vld [vmem:[%s223] sm:$0xf]
        %v255 = vmul.f32 %v253, %v254
        %257 = vset.pattern.permute.xlu0 0
        %258 = vperm.xlu0 %257, %v255
        %v259 = vpop.permute.xlu0 %258
        %v261 = vmul.f32 %v240, %v259
        %v262 = vld [vmem:[%s227] sm:$0xf]
        %264 = vset.pattern.permute.xlu0 0
        %265 = vperm.xlu0 %264, %v262
        %v266 = vpop.permute.xlu0 %265
        %v268 = vadd.f32 %v261, %v266
        %269 = vst [vmem:[%s211] sm:$0xf] %v268
        %s270 = sand.u32 %s119, 1
        %s271 = scalar_lea.sflag [#allocation3], %s270
        %s272 = sand.u32 %s119, 1
        %s273 = smul.addr %s272, 4
        %s274 = scalar_lea.vmem [#allocation2], %s273
        // Predicated region
        $region33: #{tpu_custom_call.1} parent=31 // pred_check
          %p275 = pneg %p129
        $region34: #{tpu_custom_call.1} parent=31 // pred_check_branch
          %277 = sbr.rel (%p275) target = $region36
        $region35: #{tpu_custom_call.1} parent=31 // pred_region
          %s279 = ssub.s32 64, 64
          %280 = vsyncadd %s271, %s279
          %s281 = smul.addr %s21, 2
          %s282 = sadd.s32 %s22, %s281
          %s283 = smul.addr %s282, 64
          %s284 = scalar_lea.hbm %s3, %s283
          %s286 = sshll.u32 %s274, 4
          %s287 = int_to_ptr.vmem [resolvable:$true] %s286
          %289 = dma.vmem_to_hbm [thread:$0]  %s287, 64, %s284, %s271
        $region36: #{tpu_custom_call.1} parent=31 // pred_fallthru
          _
      $region32: #{tpu_custom_call.1} parent=5 // pred_fallthru
        _
      %p290 = scmp.le.s32.totalorder 2, %s12
      // Predicated region
      $region37: #{tpu_custom_call.1} parent=5 // pred_check
        %p291 = pneg %p290
      $region38: #{tpu_custom_call.1} parent=5 // pred_check_branch
        %293 = sbr.rel (%p291) target = $region40
      $region39: #{tpu_custom_call.1} parent=5 // pred_region
        %s294 = ssub.s32 %s12, 2
        // Predicated region
        $region41: #{tpu_custom_call.1} parent=39 // pred_check
          %p295 = pneg %p135
        $region42: #{tpu_custom_call.1} parent=39 // pred_check_branch
          %297 = sbr.rel (%p295) target = $region44
        $region43: #{tpu_custom_call.1} parent=39 // pred_region
          %s298 = sand.u32 %s120, 1
          %s299 = scalar_lea.sflag [#allocation3], %s298
          %s300 = sand.u32 %s120, 1
          %s301 = smul.addr %s300, 4
          %s302 = scalar_lea.vmem [#allocation2], %s301
          %303 = dma.done %s299, 64
        $region44: #{tpu_custom_call.1} parent=39 // pred_fallthru
          _
      $region40: #{tpu_custom_call.1} parent=5 // pred_fallthru
        _
    $region6: #{tpu_custom_call.1} parent=1 // loop_footer
      %s16 = sadd.s32 1, %s12
    $region7: #{tpu_custom_call.1} parent=1 // loop_footer_branch
      %11 = sbr.rel target = $region3
    $region8: #{tpu_custom_call.1} parent=1 // loop_exit
      _
    %304 = vsyncpa [#allocation3], 1
    %s305 = scalar_lea.sflag [#allocation3], 1
    %306 = vsyncpa %s305, 1

</llo_original>
